<compile_context>
chip_gen: v6e
topology: v6e:2x2x1
jax: 0.10.0
libtpu: 0.0.40
codegen_flags: <defaults>
</compile_context>

<pallas_src>
import functools

import jax
import jax.numpy as jnp
from jax import lax
from jax.experimental import pallas as pl
from jax.experimental.pallas import tpu as pltpu


def _avgmax_pool_kernel(scale_ref, x_ref, o_ref, rowsum_ref, rowmax_ref, *,
                        kernel, stride, padding, h_in, w_in, out_h, out_w):
    """One grid step: pool a full-spatial, TILE_NC-wide channel slab.

    scale_ref  : SMEM (1,) f32
    x_ref      : VMEM (Hp, Wp, TILE_NC)      single zero-padded input slab
    o_ref      : VMEM (out_h, out_w, TILE_NC)
    rowsum_ref : VMEM (Hp, out_w, TILE_NC) f32 scratch (W-reduced sums)
    rowmax_ref : VMEM (Hp, out_w, TILE_NC) f32 scratch (W-reduced maxes)
    """
    neg_inf = jnp.float32(-jnp.inf)

    # ---- Phase 1: separable reduce along W (kernel taps -> out_w cols). ----
    for kj in range(kernel):
        # Strided per-tap Ref slice; only one tap slab is live at a time.
        tap = x_ref[:, pl.ds(kj, out_w, stride), :].astype(jnp.float32)

        # Avg path: physical zero padding == count_include_pad=True, no mask.
        if kj == 0:
            rowsum_ref[...] = tap
        else:
            rowsum_ref[...] = rowsum_ref[...] + tap

        # Max path: padded columns must behave like -inf.  Only taps whose
        # column range statically touches the border need the (cheap VPU) mask.
        first_col = kj                           # padded-coords col at ow = 0
        last_col = kj + (out_w - 1) * stride     # padded-coords col at ow = out_w-1
        if first_col < padding or last_col >= w_in + padding:
            ow_idx = lax.broadcasted_iota(jnp.int32, (out_w, 1), 0)
            col = ow_idx * stride + kj
            valid = (col >= padding) & (col < w_in + padding)
            tap_m = jnp.where(valid, tap, neg_inf)
        else:
            tap_m = tap
        if kj == 0:
            rowmax_ref[...] = tap_m
        else:
            rowmax_ref[...] = jnp.maximum(rowmax_ref[...], tap_m)

    # Padded top/bottom rows must behave like -inf for the max path.
    if padding > 0:
        hp = h_in + 2 * padding
        tile_nc = rowmax_ref.shape[2]
        fill = jnp.full((padding, out_w, tile_nc), neg_inf, jnp.float32)
        rowmax_ref[0:padding, :, :] = fill
        rowmax_ref[hp - padding:hp, :, :] = fill

    # ---- Phase 2: separable reduce along H (kernel taps -> out_h rows). ----
    s_sum = rowsum_ref[pl.ds(0, out_h, stride), :, :]
    s_max = rowmax_ref[pl.ds(0, out_h, stride), :, :]
    for ki in range(1, kernel):
        s_sum = s_sum + rowsum_ref[pl.ds(ki, out_h, stride), :, :]
        s_max = jnp.maximum(s_max, rowmax_ref[pl.ds(ki, out_h, stride), :, :])

    inv_area = jnp.float32(1.0 / float(kernel * kernel))   # count_include_pad=True
    scale = scale_ref[0]
    o_ref[...] = (s_sum * inv_area + s_max * scale).astype(o_ref.dtype)


def _pick_tile_nc(nc, hp, wp, out_h, out_w, in_itemsize, out_itemsize,
                  budget_bytes=12 * 1024 * 1024):
    """Largest lane-tile (multiple of 128, or the full dim) whose pipelined
    working set fits a conservative VMEM budget (safe on v5e/v6e/v7x defaults)."""
    def vmem_need(t):
        return (2 * hp * wp * t * in_itemsize          # double-buffered input slab
                + 2 * out_h * out_w * t * out_itemsize  # double-buffered output slab
                + 2 * hp * out_w * t * 4)               # f32 row-pool scratch
    if nc <= 128:
        # TODO(synk): for huge-spatial / tiny-channel inputs this single slab can
        # exceed VMEM; would need an additional halo'd out_H grid axis.
        return nc
    tile = 128
    while tile + 128 <= nc and vmem_need(tile + 128) <= budget_bytes:
        tile += 128
    return tile


def avgmax_pool2d(x, scale, kernel, stride, padding):
    """x: NCHW float array. scale: shape-(1,) parameter. Returns NCHW output."""
    n, c, h, w = x.shape
    out_h = (h + 2 * padding - kernel) // stride + 1
    out_w = (w + 2 * padding - kernel) // stride + 1
    nc = n * c
    hp, wp = h + 2 * padding, w + 2 * padding

    # Layout plumbing: NCHW -> (H, W, N*C) so the merged batch*channel axis is the
    # lane (last) dim.  Single zero-padded copy; transpose+pad fuse in XLA.
    x_hwc = jnp.transpose(x, (2, 3, 0, 1)).reshape(h, w, nc)
    xp = jnp.pad(x_hwc, ((padding, padding), (padding, padding), (0, 0)))

    tile_nc = _pick_tile_nc(nc, hp, wp, out_h, out_w,
                            xp.dtype.itemsize, x.dtype.itemsize)
    grid = (pl.cdiv(nc, tile_nc),)

    kernel_fn = functools.partial(
        _avgmax_pool_kernel, kernel=kernel, stride=stride, padding=padding,
        h_in=h, w_in=w, out_h=out_h, out_w=out_w)

    out_hwc = pl.pallas_call(
        kernel_fn,
        out_shape=jax.ShapeDtypeStruct((out_h, out_w, nc), x.dtype),
        grid=grid,
        in_specs=[
            pl.BlockSpec(memory_space=pltpu.MemorySpace.SMEM),        # scale (1,)
            pl.BlockSpec((hp, wp, tile_nc), lambda cb: (0, 0, cb)),   # padded input
        ],
        out_specs=pl.BlockSpec((out_h, out_w, tile_nc), lambda cb: (0, 0, cb)),
        scratch_shapes=[
            pltpu.VMEM((hp, out_w, tile_nc), jnp.float32),   # row sums
            pltpu.VMEM((hp, out_w, tile_nc), jnp.float32),   # row maxes
        ],
        compiler_params=pltpu.CompilerParams(
            dimension_semantics=("parallel",)),               # 2 TCs on v7x
    )(scale.reshape(1).astype(jnp.float32), xp)

    # (out_h, out_w, N*C) -> NCHW
    return jnp.transpose(out_hwc.reshape(out_h, out_w, n, c), (2, 3, 0, 1))


def _reference(x, scale, kernel, stride, padding):
    """Pure-JAX reference matching PyTorch AvgPool2d/MaxPool2d semantics."""
    pad4 = ((0, 0), (0, 0), (padding, padding), (padding, padding))
    xa = jnp.pad(x, pad4, constant_values=0.0)
    xm = jnp.pad(x, pad4, constant_values=-jnp.inf)
    win = (1, 1, kernel, kernel)
    strd = (1, 1, stride, stride)
    sums = lax.reduce_window(xa, 0.0, lax.add, win, strd, "VALID")
    avg = sums / float(kernel * kernel)
    mx = lax.reduce_window(xm, -jnp.inf, lax.max, win, strd, "VALID")
    return avg + mx * scale[0]


if __name__ == "__main__":
    key = jax.random.PRNGKey(0)
    x = jax.random.normal(key, (2, 4, 16, 16), dtype=jnp.float32)

    kernel, stride, padding = 3, 2, 1

    # nn.Parameter(torch.Tensor([0])) -> deterministic init 0.0
    scale = jnp.zeros((1,), dtype=jnp.float32)

    out = jax.block_until_ready(avgmax_pool2d(x, scale, kernel, stride, padding))
    ref = _reference(x, scale, kernel, stride, padding)
    assert out.shape == ref.shape == (2, 4, 8, 8), out.shape
    assert jnp.allclose(out, ref, atol=1e-5, rtol=1e-5)

    # Exercise the max-pool path too (nonzero scale), still deterministic.
    scale2 = jnp.full((1,), 0.5, dtype=jnp.float32)
    out2 = jax.block_until_ready(avgmax_pool2d(x, scale2, kernel, stride, padding))
    ref2 = _reference(x, scale2, kernel, stride, padding)
    assert jnp.allclose(out2, ref2, atol=1e-5, rtol=1e-5)

    # Odd spatial dims: exercises left/right column masks and bottom row padding.
    x3 = jax.random.normal(jax.random.PRNGKey(1), (1, 3, 7, 9), dtype=jnp.float32)
    out3 = jax.block_until_ready(avgmax_pool2d(x3, scale2, kernel, stride, padding))
    ref3 = _reference(x3, scale2, kernel, stride, padding)
    assert out3.shape == ref3.shape == (1, 3, 4, 5), out3.shape
    assert jnp.allclose(out3, ref3, atol=1e-5, rtol=1e-5)

    print("KERNEL_OK")
</pallas_src>

<mosaic_0001>
module attributes {stable_mosaic.version = 11 : i64} {
  func.func @_avgmax_pool_kernel(%arg0: i32, %arg1: memref<1xf32, #tpu.memory_space<smem>>, %arg2: memref<18x18x8xf32, #tpu.memory_space<vmem>>, %arg3: memref<8x8x8xf32, #tpu.memory_space<vmem>>, %arg4: memref<18x8x8xf32, #tpu.memory_space<vmem>>, %arg5: memref<18x8x8xf32, #tpu.memory_space<vmem>>) attributes {dimension_semantics = [#tpu.dimension_semantics<parallel>], iteration_bounds = array<i64: 1>, scalar_prefetch = 0 : i64, scratch_operands = 2 : i64, tpu.core_type = #tpu.core_type<tc>, window_params = [{transform_indices = @transform_0, window_bounds = array<i64: 1>}, {transform_indices = @transform_1, window_bounds = array<i64: 18, 18, 8>}, {transform_indices = @transform_2, window_bounds = array<i64: 8, 8, 8>}]} {
    %c0 = arith.constant 0 : index
    %c0_0 = arith.constant 0 : index
    %c0_1 = arith.constant 0 : index
    %0 = tpu.strided_load %arg2[%c0, %c0_0, %c0_1] {strides = array<i32: 1, 2, 1>} : memref<18x18x8xf32, #tpu.memory_space<vmem>>, vector<18x8x8xf32>
    %c0_2 = arith.constant 0 : index
    %c0_3 = arith.constant 0 : index
    %c0_4 = arith.constant 0 : index
    %1 = vector.load %arg4[%c0_2, %c0_3, %c0_4] : memref<18x8x8xf32, #tpu.memory_space<vmem>>, vector<18x8x8xf32>
    tpu.vector_store %arg4[%c0_2, %c0_3, %c0_4], %0 {strides = array<i32>} : memref<18x8x8xf32, #tpu.memory_space<vmem>>, vector<18x8x8xf32>,
    %2 = tpu.iota {dimensions = array<i32: 0>} : vector<8x1xi32>
    %c2_i32 = arith.constant 2 : i32
    %3 = vector.broadcast %c2_i32 : i32 to vector<8x1xi32>
    %4 = arith.muli %2, %3 : vector<8x1xi32>
    %c0_i32 = arith.constant 0 : i32
    %5 = vector.broadcast %c0_i32 : i32 to vector<8x1xi32>
    %6 = arith.addi %4, %5 : vector<8x1xi32>
    %c1_i32 = arith.constant 1 : i32
    %7 = vector.broadcast %c1_i32 : i32 to vector<8x1xi32>
    %8 = arith.cmpi sge, %6, %7 : vector<8x1xi32>
    %c17_i32 = arith.constant 17 : i32
    %9 = vector.broadcast %c17_i32 : i32 to vector<8x1xi32>
    %10 = arith.cmpi slt, %6, %9 : vector<8x1xi32>
    %11 = arith.andi %8, %10 : vector<8x1xi1>
    %cst = arith.constant 0xFF800000 : f32
    %12 = vector.shape_cast %11 : vector<8x1xi1> to vector<1x8x1xi1>
    %13 = vector.broadcast %12 : vector<1x8x1xi1> to vector<18x8x8xi1>
    %14 = vector.broadcast %cst : f32 to vector<18x8x8xf32>
    %15 = arith.select %13, %0, %14 : vector<18x8x8xi1>, vector<18x8x8xf32>
    %c0_5 = arith.constant 0 : index
    %c0_6 = arith.constant 0 : index
    %c0_7 = arith.constant 0 : index
    %16 = vector.load %arg5[%c0_5, %c0_6, %c0_7] : memref<18x8x8xf32, #tpu.memory_space<vmem>>, vector<18x8x8xf32>
    tpu.vector_store %arg5[%c0_5, %c0_6, %c0_7], %15 {strides = array<i32>} : memref<18x8x8xf32, #tpu.memory_space<vmem>>, vector<18x8x8xf32>,
    %c0_8 = arith.constant 0 : index
    %c1 = arith.constant 1 : index
    %c0_9 = arith.constant 0 : index
    %17 = tpu.strided_load %arg2[%c0_8, %c1, %c0_9] {strides = array<i32: 1, 2, 1>} : memref<18x18x8xf32, #tpu.memory_space<vmem>>, vector<18x8x8xf32>
    %c0_10 = arith.constant 0 : index
    %c0_11 = arith.constant 0 : index
    %c0_12 = arith.constant 0 : index
    %18 = vector.load %arg4[%c0_10, %c0_11, %c0_12] : memref<18x8x8xf32, #tpu.memory_space<vmem>>, vector<18x8x8xf32>
    %19 = arith.addf %18, %17 : vector<18x8x8xf32>
    %c0_13 = arith.constant 0 : index
    %c0_14 = arith.constant 0 : index
    %c0_15 = arith.constant 0 : index
    %20 = vector.load %arg4[%c0_13, %c0_14, %c0_15] : memref<18x8x8xf32, #tpu.memory_space<vmem>>, vector<18x8x8xf32>
    tpu.vector_store %arg4[%c0_13, %c0_14, %c0_15], %19 {strides = array<i32>} : memref<18x8x8xf32, #tpu.memory_space<vmem>>, vector<18x8x8xf32>,
    %c0_16 = arith.constant 0 : index
    %c0_17 = arith.constant 0 : index
    %c0_18 = arith.constant 0 : index
    %21 = vector.load %arg5[%c0_16, %c0_17, %c0_18] : memref<18x8x8xf32, #tpu.memory_space<vmem>>, vector<18x8x8xf32>
    %22 = arith.maximumf %21, %17 : vector<18x8x8xf32>
    %c0_19 = arith.constant 0 : index
    %c0_20 = arith.constant 0 : index
    %c0_21 = arith.constant 0 : index
    %23 = vector.load %arg5[%c0_19, %c0_20, %c0_21] : memref<18x8x8xf32, #tpu.memory_space<vmem>>, vector<18x8x8xf32>
    tpu.vector_store %arg5[%c0_19, %c0_20, %c0_21], %22 {strides = array<i32>} : memref<18x8x8xf32, #tpu.memory_space<vmem>>, vector<18x8x8xf32>,
    %c0_22 = arith.constant 0 : index
    %c2 = arith.constant 2 : index
    %c0_23 = arith.constant 0 : index
    %24 = tpu.strided_load %arg2[%c0_22, %c2, %c0_23] {strides = array<i32: 1, 2, 1>} : memref<18x18x8xf32, #tpu.memory_space<vmem>>, vector<18x8x8xf32>
    %c0_24 = arith.constant 0 : index
    %c0_25 = arith.constant 0 : index
    %c0_26 = arith.constant 0 : index
    %25 = vector.load %arg4[%c0_24, %c0_25, %c0_26] : memref<18x8x8xf32, #tpu.memory_space<vmem>>, vector<18x8x8xf32>
    %26 = arith.addf %25, %24 : vector<18x8x8xf32>
    %c0_27 = arith.constant 0 : index
    %c0_28 = arith.constant 0 : index
    %c0_29 = arith.constant 0 : index
    %27 = vector.load %arg4[%c0_27, %c0_28, %c0_29] : memref<18x8x8xf32, #tpu.memory_space<vmem>>, vector<18x8x8xf32>
    tpu.vector_store %arg4[%c0_27, %c0_28, %c0_29], %26 {strides = array<i32>} : memref<18x8x8xf32, #tpu.memory_space<vmem>>, vector<18x8x8xf32>,
    %c0_30 = arith.constant 0 : index
    %c0_31 = arith.constant 0 : index
    %c0_32 = arith.constant 0 : index
    %28 = vector.load %arg5[%c0_30, %c0_31, %c0_32] : memref<18x8x8xf32, #tpu.memory_space<vmem>>, vector<18x8x8xf32>
    %29 = arith.maximumf %28, %24 : vector<18x8x8xf32>
    %c0_33 = arith.constant 0 : index
    %c0_34 = arith.constant 0 : index
    %c0_35 = arith.constant 0 : index
    %30 = vector.load %arg5[%c0_33, %c0_34, %c0_35] : memref<18x8x8xf32, #tpu.memory_space<vmem>>, vector<18x8x8xf32>
    tpu.vector_store %arg5[%c0_33, %c0_34, %c0_35], %29 {strides = array<i32>} : memref<18x8x8xf32, #tpu.memory_space<vmem>>, vector<18x8x8xf32>,
    %cst_36 = arith.constant 0xFF800000 : f32
    %31 = vector.broadcast %cst_36 : f32 to vector<1x8x8xf32>
    %c0_37 = arith.constant 0 : index
    %c0_38 = arith.constant 0 : index
    %c0_39 = arith.constant 0 : index
    %32 = vector.load %arg5[%c0_37, %c0_38, %c0_39] : memref<18x8x8xf32, #tpu.memory_space<vmem>>, vector<1x8x8xf32>
    tpu.vector_store %arg5[%c0_37, %c0_38, %c0_39], %31 {strides = array<i32>} : memref<18x8x8xf32, #tpu.memory_space<vmem>>, vector<1x8x8xf32>,
    %c17 = arith.constant 17 : index
    %c0_40 = arith.constant 0 : index
    %c0_41 = arith.constant 0 : index
    %33 = vector.load %arg5[%c17, %c0_40, %c0_41] : memref<18x8x8xf32, #tpu.memory_space<vmem>>, vector<1x8x8xf32>
    tpu.vector_store %arg5[%c17, %c0_40, %c0_41], %31 {strides = array<i32>} : memref<18x8x8xf32, #tpu.memory_space<vmem>>, vector<1x8x8xf32>,
    %c0_42 = arith.constant 0 : index
    %c0_43 = arith.constant 0 : index
    %c0_44 = arith.constant 0 : index
    %34 = tpu.strided_load %arg4[%c0_42, %c0_43, %c0_44] {strides = array<i32: 2, 1, 1>} : memref<18x8x8xf32, #tpu.memory_space<vmem>>, vector<8x8x8xf32>
    %c0_45 = arith.constant 0 : index
    %c0_46 = arith.constant 0 : index
    %c0_47 = arith.constant 0 : index
    %35 = tpu.strided_load %arg5[%c0_45, %c0_46, %c0_47] {strides = array<i32: 2, 1, 1>} : memref<18x8x8xf32, #tpu.memory_space<vmem>>, vector<8x8x8xf32>
    %c1_48 = arith.constant 1 : index
    %c0_49 = arith.constant 0 : index
    %c0_50 = arith.constant 0 : index
    %36 = tpu.strided_load %arg4[%c1_48, %c0_49, %c0_50] {strides = array<i32: 2, 1, 1>} : memref<18x8x8xf32, #tpu.memory_space<vmem>>, vector<8x8x8xf32>
    %37 = arith.addf %34, %36 : vector<8x8x8xf32>
    %c1_51 = arith.constant 1 : index
    %c0_52 = arith.constant 0 : index
    %c0_53 = arith.constant 0 : index
    %38 = tpu.strided_load %arg5[%c1_51, %c0_52, %c0_53] {strides = array<i32: 2, 1, 1>} : memref<18x8x8xf32, #tpu.memory_space<vmem>>, vector<8x8x8xf32>
    %39 = arith.maximumf %35, %38 : vector<8x8x8xf32>
    %c2_54 = arith.constant 2 : index
    %c0_55 = arith.constant 0 : index
    %c0_56 = arith.constant 0 : index
    %40 = tpu.strided_load %arg4[%c2_54, %c0_55, %c0_56] {strides = array<i32: 2, 1, 1>} : memref<18x8x8xf32, #tpu.memory_space<vmem>>, vector<8x8x8xf32>
    %41 = arith.addf %37, %40 : vector<8x8x8xf32>
    %c2_57 = arith.constant 2 : index
    %c0_58 = arith.constant 0 : index
    %c0_59 = arith.constant 0 : index
    %42 = tpu.strided_load %arg5[%c2_57, %c0_58, %c0_59] {strides = array<i32: 2, 1, 1>} : memref<18x8x8xf32, #tpu.memory_space<vmem>>, vector<8x8x8xf32>
    %43 = arith.maximumf %39, %42 : vector<8x8x8xf32>
    %c0_60 = arith.constant 0 : index
    %44 = memref.load %arg1[%c0_60] : memref<1xf32, #tpu.memory_space<smem>>
    %cst_61 = arith.constant 0.111111112 : f32
    %45 = vector.broadcast %cst_61 : f32 to vector<8x8x8xf32>
    %46 = arith.mulf %41, %45 : vector<8x8x8xf32>
    %47 = vector.broadcast %44 : f32 to vector<8x8x8xf32>
    %48 = arith.mulf %43, %47 : vector<8x8x8xf32>
    %49 = arith.addf %46, %48 : vector<8x8x8xf32>
    %c0_62 = arith.constant 0 : index
    %c0_63 = arith.constant 0 : index
    %c0_64 = arith.constant 0 : index
    %50 = vector.load %arg3[%c0_62, %c0_63, %c0_64] : memref<8x8x8xf32, #tpu.memory_space<vmem>>, vector<8x8x8xf32>
    tpu.vector_store %arg3[%c0_62, %c0_63, %c0_64], %49 {strides = array<i32>} : memref<8x8x8xf32, #tpu.memory_space<vmem>>, vector<8x8x8xf32>,
    return
  }
  func.func @transform_0(%arg0: i32) -> i32 {
    %c0_i32 = arith.constant 0 : i32
    %c0_i32_0 = arith.constant 0 : i32
    return %c0_i32 : i32
  }
  func.func @transform_1(%arg0: i32) -> (i32, i32, i32) {
    %c0_i32 = arith.constant 0 : i32
    %c0_i32_0 = arith.constant 0 : i32
    %c0_i32_1 = arith.constant 0 : i32
    return %c0_i32, %c0_i32_0, %arg0 : i32, i32, i32
  }
  func.func @transform_2(%arg0: i32) -> (i32, i32, i32) {
    %c0_i32 = arith.constant 0 : i32
    %c0_i32_0 = arith.constant 0 : i32
    %c0_i32_1 = arith.constant 0 : i32
    return %c0_i32, %c0_i32_0, %arg0 : i32, i32, i32
  }
}

</mosaic_0001>

<llo_original>
// kernel: tpu_custom_call.1
$region0: #{tpu_custom_call.1}
  #allocation0 [shape = 'u32[]', space=smem, size = 0x4, offset = 0x4, fixed_abs, tag = 'smem constant byte address 0x4 - core index']
  #allocation1 [shape = 'u32[144,128]{1,0:T(1,128)}', space=vmem, size = 0x12000, scoped, tag = 'internal scratch']
  #allocation2 [shape = 'f32[18,8,8]{2,1,0:T(8,128)}', space=vmem, size = 0x12000, scoped, tag = 'scratch operand']
  #allocation3 [shape = 'f32[18,8,8]{2,1,0:T(8,128)}', space=vmem, size = 0x12000, scoped, tag = 'scratch operand']
  #allocation4 [shape = 'f32[1]{0:T(128)S(6)}', space=smem, size = 0x200, scoped, tag = 'scoped memory for tpu_custom_call.1']
  %s0 = inlined_call_operand.<no memory space> [shape: f32[1], index: 0, kind: input, shape index: {}]
  %s1 = inlined_call_operand.vmem [shape: f32[18,18,8], index: 1, kind: input, shape index: {}]
  %s2 = inlined_call_operand.hbm [shape: f32[8,8,8], index: 2, kind: output, shape index: {}]
  %s3 = sld [smem:[#allocation0]]
  $region18: #{tpu_custom_call.1} parent=0
    _
  %s5 = ssub.s32 1, %s3
  %s6 = scalar_select 0, %s5, %s3
  %7 = sst [smem:[#allocation4]] %s0
  $region1: #{tpu_custom_call.1} parent=0
    #allocation5 [shape = 'u8[32768]{0}', space=vmem, size = 0x8000, scoped, tag = 'output window, operand 0, single buffered']
    #allocation6 [shape = 's32[1]{0}', space=sflag, size = 0x4, scoped, tag = 'scoped memory for tpu_custom_call.1']
    %8 = vsyncpa [#allocation6], 0
    // Predicated region
    $region2: #{tpu_custom_call.1} parent=1 // pred_check
      _
    $region3: #{tpu_custom_call.1} parent=1 // pred_check_branch
      %10 = sbr.rel (0) target = $region5
    $region4: #{tpu_custom_call.1} parent=1 // pred_region
      _
    $region5: #{tpu_custom_call.1} parent=1 // pred_fallthru
      _
    // Predicated region
    $region6: #{tpu_custom_call.1} parent=1 // pred_check
      _
    $region7: #{tpu_custom_call.1} parent=1 // pred_check_branch
      %12 = sbr.rel (0) target = $region9
    $region8: #{tpu_custom_call.1} parent=1 // pred_region
      _
    $region9: #{tpu_custom_call.1} parent=1 // pred_fallthru
      _
    %v13 = vld [vmem:[%s1] ss:$2 sm:$0xff]
    %s14 = scalar_lea.vmem %s1, 24
    %v15 = vld [vmem:[%s14] ss:$2 sm:$0xff]
    %s16 = scalar_lea.vmem %s1, 48
    %v17 = vld [vmem:[%s16] ss:$2 sm:$0xff]
    %s18 = scalar_lea.vmem %s1, 72
    %v19 = vld [vmem:[%s18] ss:$2 sm:$0xff]
    %s20 = scalar_lea.vmem %s1, 96
    %v21 = vld [vmem:[%s20] ss:$2 sm:$0xff]
    %s22 = scalar_lea.vmem %s1, 120
    %v23 = vld [vmem:[%s22] ss:$2 sm:$0xff]
    %s24 = scalar_lea.vmem %s1, 144
    %v25 = vld [vmem:[%s24] ss:$2 sm:$0xff]
    %s26 = scalar_lea.vmem %s1, 168
    %v27 = vld [vmem:[%s26] ss:$2 sm:$0xff]
    %s28 = scalar_lea.vmem %s1, 192
    %v29 = vld [vmem:[%s28] ss:$2 sm:$0xff]
    %s30 = scalar_lea.vmem %s1, 216
    %v31 = vld [vmem:[%s30] ss:$2 sm:$0xff]
    %s32 = scalar_lea.vmem %s1, 240
    %v33 = vld [vmem:[%s32] ss:$2 sm:$0xff]
    %s34 = scalar_lea.vmem %s1, 264
    %v35 = vld [vmem:[%s34] ss:$2 sm:$0xff]
    %s36 = scalar_lea.vmem %s1, 288
    %v37 = vld [vmem:[%s36] ss:$2 sm:$0xff]
    %s38 = scalar_lea.vmem %s1, 312
    %v39 = vld [vmem:[%s38] ss:$2 sm:$0xff]
    %s40 = scalar_lea.vmem %s1, 336
    %v41 = vld [vmem:[%s40] ss:$2 sm:$0xff]
    %s42 = scalar_lea.vmem %s1, 360
    %v43 = vld [vmem:[%s42] ss:$2 sm:$0xff]
    %s44 = scalar_lea.vmem %s1, 384
    %v45 = vld [vmem:[%s44] ss:$2 sm:$0xff]
    %s46 = scalar_lea.vmem %s1, 408
    %v47 = vld [vmem:[%s46] ss:$2 sm:$0xff]
    %vm48 = vcmask 64512
    %49 = vst.msk [vmem:[#allocation2] sm:$0xff] %vm48, %v13
    %50 = vst.msk [vmem:[#allocation2 + $0x8] sm:$0xff] %vm48, %v15
    %51 = vst.msk [vmem:[#allocation2 + $0x10] sm:$0xff] %vm48, %v17
    %52 = vst.msk [vmem:[#allocation2 + $0x18] sm:$0xff] %vm48, %v19
    %53 = vst.msk [vmem:[#allocation2 + $0x20] sm:$0xff] %vm48, %v21
    %54 = vst.msk [vmem:[#allocation2 + $0x28] sm:$0xff] %vm48, %v23
    %55 = vst.msk [vmem:[#allocation2 + $0x30] sm:$0xff] %vm48, %v25
    %56 = vst.msk [vmem:[#allocation2 + $0x38] sm:$0xff] %vm48, %v27
    %57 = vst.msk [vmem:[#allocation2 + $0x40] sm:$0xff] %vm48, %v29
    %58 = vst.msk [vmem:[#allocation2 + $0x48] sm:$0xff] %vm48, %v31
    %59 = vst.msk [vmem:[#allocation2 + $0x50] sm:$0xff] %vm48, %v33
    %60 = vst.msk [vmem:[#allocation2 + $0x58] sm:$0xff] %vm48, %v35
    %61 = vst.msk [vmem:[#allocation2 + $0x60] sm:$0xff] %vm48, %v37
    %62 = vst.msk [vmem:[#allocation2 + $0x68] sm:$0xff] %vm48, %v39
    %63 = vst.msk [vmem:[#allocation2 + $0x70] sm:$0xff] %vm48, %v41
    %64 = vst.msk [vmem:[#allocation2 + $0x78] sm:$0xff] %vm48, %v43
    %65 = vst.msk [vmem:[#allocation2 + $0x80] sm:$0xff] %vm48, %v45
    %66 = vst.msk [vmem:[#allocation2 + $0x88] sm:$0xff] %vm48, %v47
    %v67 = vlaneseq
    %v68 = vshrl.u32 %v67, 7
    %v69 = vmul.u32 %v68, 2
    %vm70 = vcmp.ge.s32.totalorder %v69, 1
    %vm71 = vcmp.lt.s32.totalorder %v69, 17
    %vm72 = vmand %vm70, %vm71
    %v73 = vsel %vm72, 1, 0
    %vm74 = vcmp.eq.s32.totalorder %v73, 1
    %v75 = vsel %vm74, %v13, -inf
    %v76 = vsel %vm74, %v15, -inf
    %v77 = vsel %vm74, %v17, -inf
    %v78 = vsel %vm74, %v19, -inf
    %v79 = vsel %vm74, %v21, -inf
    %v80 = vsel %vm74, %v23, -inf
    %v81 = vsel %vm74, %v25, -inf
    %v82 = vsel %vm74, %v27, -inf
    %v83 = vsel %vm74, %v29, -inf
    %v84 = vsel %vm74, %v31, -inf
    %v85 = vsel %vm74, %v33, -inf
    %v86 = vsel %vm74, %v35, -inf
    %v87 = vsel %vm74, %v37, -inf
    %v88 = vsel %vm74, %v39, -inf
    %v89 = vsel %vm74, %v41, -inf
    %v90 = vsel %vm74, %v43, -inf
    %v91 = vsel %vm74, %v45, -inf
    %v92 = vsel %vm74, %v47, -inf
    %93 = vst.msk [vmem:[#allocation3] sm:$0xff] %vm48, %v75
    %94 = vst.msk [vmem:[#allocation3 + $0x8] sm:$0xff] %vm48, %v76
    %95 = vst.msk [vmem:[#allocation3 + $0x10] sm:$0xff] %vm48, %v77
    %96 = vst.msk [vmem:[#allocation3 + $0x18] sm:$0xff] %vm48, %v78
    %97 = vst.msk [vmem:[#allocation3 + $0x20] sm:$0xff] %vm48, %v79
    %98 = vst.msk [vmem:[#allocation3 + $0x28] sm:$0xff] %vm48, %v80
    %99 = vst.msk [vmem:[#allocation3 + $0x30] sm:$0xff] %vm48, %v81
    %100 = vst.msk [vmem:[#allocation3 + $0x38] sm:$0xff] %vm48, %v82
    %101 = vst.msk [vmem:[#allocation3 + $0x40] sm:$0xff] %vm48, %v83
    %102 = vst.msk [vmem:[#allocation3 + $0x48] sm:$0xff] %vm48, %v84
    %103 = vst.msk [vmem:[#allocation3 + $0x50] sm:$0xff] %vm48, %v85
    %104 = vst.msk [vmem:[#allocation3 + $0x58] sm:$0xff] %vm48, %v86
    %105 = vst.msk [vmem:[#allocation3 + $0x60] sm:$0xff] %vm48, %v87
    %106 = vst.msk [vmem:[#allocation3 + $0x68] sm:$0xff] %vm48, %v88
    %107 = vst.msk [vmem:[#allocation3 + $0x70] sm:$0xff] %vm48, %v89
    %108 = vst.msk [vmem:[#allocation3 + $0x78] sm:$0xff] %vm48, %v90
    %109 = vst.msk [vmem:[#allocation3 + $0x80] sm:$0xff] %vm48, %v91
    %110 = vst.msk [vmem:[#allocation3 + $0x88] sm:$0xff] %vm48, %v92
    %s111 = scalar_lea.vmem %s1, 1
    %v112 = vld [vmem:[%s111] ss:$2 sm:$0xff]
    %s113 = scalar_lea.vmem %s1, 25
    %v114 = vld [vmem:[%s113] ss:$2 sm:$0xff]
    %s115 = scalar_lea.vmem %s1, 49
    %v116 = vld [vmem:[%s115] ss:$2 sm:$0xff]
    %s117 = scalar_lea.vmem %s1, 73
    %v118 = vld [vmem:[%s117] ss:$2 sm:$0xff]
    %s119 = scalar_lea.vmem %s1, 97
    %v120 = vld [vmem:[%s119] ss:$2 sm:$0xff]
    %s121 = scalar_lea.vmem %s1, 121
    %v122 = vld [vmem:[%s121] ss:$2 sm:$0xff]
    %s123 = scalar_lea.vmem %s1, 145
    %v124 = vld [vmem:[%s123] ss:$2 sm:$0xff]
    %s125 = scalar_lea.vmem %s1, 169
    %v126 = vld [vmem:[%s125] ss:$2 sm:$0xff]
    %s127 = scalar_lea.vmem %s1, 193
    %v128 = vld [vmem:[%s127] ss:$2 sm:$0xff]
    %s129 = scalar_lea.vmem %s1, 217
    %v130 = vld [vmem:[%s129] ss:$2 sm:$0xff]
    %s131 = scalar_lea.vmem %s1, 241
    %v132 = vld [vmem:[%s131] ss:$2 sm:$0xff]
    %s133 = scalar_lea.vmem %s1, 265
    %v134 = vld [vmem:[%s133] ss:$2 sm:$0xff]
    %s135 = scalar_lea.vmem %s1, 289
    %v136 = vld [vmem:[%s135] ss:$2 sm:$0xff]
    %s137 = scalar_lea.vmem %s1, 313
    %v138 = vld [vmem:[%s137] ss:$2 sm:$0xff]
    %s139 = scalar_lea.vmem %s1, 337
    %v140 = vld [vmem:[%s139] ss:$2 sm:$0xff]
    %s141 = scalar_lea.vmem %s1, 361
    %v142 = vld [vmem:[%s141] ss:$2 sm:$0xff]
    %s143 = scalar_lea.vmem %s1, 385
    %v144 = vld [vmem:[%s143] ss:$2 sm:$0xff]
    %s145 = scalar_lea.vmem %s1, 409
    %v146 = vld [vmem:[%s145] ss:$2 sm:$0xff]
    %v147 = vld [vmem:[#allocation2] sm:$0xff]
    %v148 = vld [vmem:[#allocation2 + $0x8] sm:$0xff]
    %v149 = vld [vmem:[#allocation2 + $0x10] sm:$0xff]
    %v150 = vld [vmem:[#allocation2 + $0x18] sm:$0xff]
    %v151 = vld [vmem:[#allocation2 + $0x20] sm:$0xff]
    %v152 = vld [vmem:[#allocation2 + $0x28] sm:$0xff]
    %v153 = vld [vmem:[#allocation2 + $0x30] sm:$0xff]
    %v154 = vld [vmem:[#allocation2 + $0x38] sm:$0xff]
    %v155 = vld [vmem:[#allocation2 + $0x40] sm:$0xff]
    %v156 = vld [vmem:[#allocation2 + $0x48] sm:$0xff]
    %v157 = vld [vmem:[#allocation2 + $0x50] sm:$0xff]
    %v158 = vld [vmem:[#allocation2 + $0x58] sm:$0xff]
    %v159 = vld [vmem:[#allocation2 + $0x60] sm:$0xff]
    %v160 = vld [vmem:[#allocation2 + $0x68] sm:$0xff]
    %v161 = vld [vmem:[#allocation2 + $0x70] sm:$0xff]
    %v162 = vld [vmem:[#allocation2 + $0x78] sm:$0xff]
    %v163 = vld [vmem:[#allocation2 + $0x80] sm:$0xff]
    %v164 = vld [vmem:[#allocation2 + $0x88] sm:$0xff]
    %v165 = vadd.f32 %v147, %v112
    %v166 = vadd.f32 %v148, %v114
    %v167 = vadd.f32 %v149, %v116
    %v168 = vadd.f32 %v150, %v118
    %v169 = vadd.f32 %v151, %v120
    %v170 = vadd.f32 %v152, %v122
    %v171 = vadd.f32 %v153, %v124
    %v172 = vadd.f32 %v154, %v126
    %v173 = vadd.f32 %v155, %v128
    %v174 = vadd.f32 %v156, %v130
    %v175 = vadd.f32 %v157, %v132
    %v176 = vadd.f32 %v158, %v134
    %v177 = vadd.f32 %v159, %v136
    %v178 = vadd.f32 %v160, %v138
    %v179 = vadd.f32 %v161, %v140
    %v180 = vadd.f32 %v162, %v142
    %v181 = vadd.f32 %v163, %v144
    %v182 = vadd.f32 %v164, %v146
    %183 = vst.msk [vmem:[#allocation2] sm:$0xff] %vm48, %v165
    %184 = vst.msk [vmem:[#allocation2 + $0x8] sm:$0xff] %vm48, %v166
    %185 = vst.msk [vmem:[#allocation2 + $0x10] sm:$0xff] %vm48, %v167
    %186 = vst.msk [vmem:[#allocation2 + $0x18] sm:$0xff] %vm48, %v168
    %187 = vst.msk [vmem:[#allocation2 + $0x20] sm:$0xff] %vm48, %v169
    %188 = vst.msk [vmem:[#allocation2 + $0x28] sm:$0xff] %vm48, %v170
    %189 = vst.msk [vmem:[#allocation2 + $0x30] sm:$0xff] %vm48, %v171
    %190 = vst.msk [vmem:[#allocation2 + $0x38] sm:$0xff] %vm48, %v172
    %191 = vst.msk [vmem:[#allocation2 + $0x40] sm:$0xff] %vm48, %v173
    %192 = vst.msk [vmem:[#allocation2 + $0x48] sm:$0xff] %vm48, %v174
    %193 = vst.msk [vmem:[#allocation2 + $0x50] sm:$0xff] %vm48, %v175
    %194 = vst.msk [vmem:[#allocation2 + $0x58] sm:$0xff] %vm48, %v176
    %195 = vst.msk [vmem:[#allocation2 + $0x60] sm:$0xff] %vm48, %v177
    %196 = vst.msk [vmem:[#allocation2 + $0x68] sm:$0xff] %vm48, %v178
    %197 = vst.msk [vmem:[#allocation2 + $0x70] sm:$0xff] %vm48, %v179
    %198 = vst.msk [vmem:[#allocation2 + $0x78] sm:$0xff] %vm48, %v180
    %199 = vst.msk [vmem:[#allocation2 + $0x80] sm:$0xff] %vm48, %v181
    %200 = vst.msk [vmem:[#allocation2 + $0x88] sm:$0xff] %vm48, %v182
    %v201 = vld [vmem:[#allocation3] sm:$0xff]
    %v202 = vld [vmem:[#allocation3 + $0x8] sm:$0xff]
    %v203 = vld [vmem:[#allocation3 + $0x10] sm:$0xff]
    %v204 = vld [vmem:[#allocation3 + $0x18] sm:$0xff]
    %v205 = vld [vmem:[#allocation3 + $0x20] sm:$0xff]
    %v206 = vld [vmem:[#allocation3 + $0x28] sm:$0xff]
    %v207 = vld [vmem:[#allocation3 + $0x30] sm:$0xff]
    %v208 = vld [vmem:[#allocation3 + $0x38] sm:$0xff]
    %v209 = vld [vmem:[#allocation3 + $0x40] sm:$0xff]
    %v210 = vld [vmem:[#allocation3 + $0x48] sm:$0xff]
    %v211 = vld [vmem:[#allocation3 + $0x50] sm:$0xff]
    %v212 = vld [vmem:[#allocation3 + $0x58] sm:$0xff]
    %v213 = vld [vmem:[#allocation3 + $0x60] sm:$0xff]
    %v214 = vld [vmem:[#allocation3 + $0x68] sm:$0xff]
    %v215 = vld [vmem:[#allocation3 + $0x70] sm:$0xff]
    %v216 = vld [vmem:[#allocation3 + $0x78] sm:$0xff]
    %v217 = vld [vmem:[#allocation3 + $0x80] sm:$0xff]
    %v218 = vld [vmem:[#allocation3 + $0x88] sm:$0xff]
    %v219 = vmax.f32 %v201, %v112
    %v220 = vmax.f32 %v202, %v114
    %v221 = vmax.f32 %v203, %v116
    %v222 = vmax.f32 %v204, %v118
    %v223 = vmax.f32 %v205, %v120
    %v224 = vmax.f32 %v206, %v122
    %v225 = vmax.f32 %v207, %v124
    %v226 = vmax.f32 %v208, %v126
    %v227 = vmax.f32 %v209, %v128
    %v228 = vmax.f32 %v210, %v130
    %v229 = vmax.f32 %v211, %v132
    %v230 = vmax.f32 %v212, %v134
    %v231 = vmax.f32 %v213, %v136
    %v232 = vmax.f32 %v214, %v138
    %v233 = vmax.f32 %v215, %v140
    %v234 = vmax.f32 %v216, %v142
    %v235 = vmax.f32 %v217, %v144
    %v236 = vmax.f32 %v218, %v146
    %237 = vst.msk [vmem:[#allocation3] sm:$0xff] %vm48, %v219
    %238 = vst.msk [vmem:[#allocation3 + $0x8] sm:$0xff] %vm48, %v220
    %239 = vst.msk [vmem:[#allocation3 + $0x10] sm:$0xff] %vm48, %v221
    %240 = vst.msk [vmem:[#allocation3 + $0x18] sm:$0xff] %vm48, %v222
    %241 = vst.msk [vmem:[#allocation3 + $0x20] sm:$0xff] %vm48, %v223
    %242 = vst.msk [vmem:[#allocation3 + $0x28] sm:$0xff] %vm48, %v224
    %243 = vst.msk [vmem:[#allocation3 + $0x30] sm:$0xff] %vm48, %v225
    %244 = vst.msk [vmem:[#allocation3 + $0x38] sm:$0xff] %vm48, %v226
    %245 = vst.msk [vmem:[#allocation3 + $0x40] sm:$0xff] %vm48, %v227
    %246 = vst.msk [vmem:[#allocation3 + $0x48] sm:$0xff] %vm48, %v228
    %247 = vst.msk [vmem:[#allocation3 + $0x50] sm:$0xff] %vm48, %v229
    %248 = vst.msk [vmem:[#allocation3 + $0x58] sm:$0xff] %vm48, %v230
    %249 = vst.msk [vmem:[#allocation3 + $0x60] sm:$0xff] %vm48, %v231
    %250 = vst.msk [vmem:[#allocation3 + $0x68] sm:$0xff] %vm48, %v232
    %251 = vst.msk [vmem:[#allocation3 + $0x70] sm:$0xff] %vm48, %v233
    %252 = vst.msk [vmem:[#allocation3 + $0x78] sm:$0xff] %vm48, %v234
    %253 = vst.msk [vmem:[#allocation3 + $0x80] sm:$0xff] %vm48, %v235
    %254 = vst.msk [vmem:[#allocation3 + $0x88] sm:$0xff] %vm48, %v236
    %s255 = scalar_lea.vmem %s1, 2
    %v256 = vld [vmem:[%s255] ss:$2 sm:$0xff]
    %s257 = scalar_lea.vmem %s1, 26
    %v258 = vld [vmem:[%s257] ss:$2 sm:$0xff]
    %s259 = scalar_lea.vmem %s1, 50
    %v260 = vld [vmem:[%s259] ss:$2 sm:$0xff]
    %s261 = scalar_lea.vmem %s1, 74
    %v262 = vld [vmem:[%s261] ss:$2 sm:$0xff]
    %s263 = scalar_lea.vmem %s1, 98
    %v264 = vld [vmem:[%s263] ss:$2 sm:$0xff]
    %s265 = scalar_lea.vmem %s1, 122
    %v266 = vld [vmem:[%s265] ss:$2 sm:$0xff]
    %s267 = scalar_lea.vmem %s1, 146
    %v268 = vld [vmem:[%s267] ss:$2 sm:$0xff]
    %s269 = scalar_lea.vmem %s1, 170
    %v270 = vld [vmem:[%s269] ss:$2 sm:$0xff]
    %s271 = scalar_lea.vmem %s1, 194
    %v272 = vld [vmem:[%s271] ss:$2 sm:$0xff]
    %s273 = scalar_lea.vmem %s1, 218
    %v274 = vld [vmem:[%s273] ss:$2 sm:$0xff]
    %s275 = scalar_lea.vmem %s1, 242
    %v276 = vld [vmem:[%s275] ss:$2 sm:$0xff]
    %s277 = scalar_lea.vmem %s1, 266
    %v278 = vld [vmem:[%s277] ss:$2 sm:$0xff]
    %s279 = scalar_lea.vmem %s1, 290
    %v280 = vld [vmem:[%s279] ss:$2 sm:$0xff]
    %s281 = scalar_lea.vmem %s1, 314
    %v282 = vld [vmem:[%s281] ss:$2 sm:$0xff]
    %s283 = scalar_lea.vmem %s1, 338
    %v284 = vld [vmem:[%s283] ss:$2 sm:$0xff]
    %s285 = scalar_lea.vmem %s1, 362
    %v286 = vld [vmem:[%s285] ss:$2 sm:$0xff]
    %s287 = scalar_lea.vmem %s1, 386
    %v288 = vld [vmem:[%s287] ss:$2 sm:$0xff]
    %s289 = scalar_lea.vmem %s1, 410
    %v290 = vld [vmem:[%s289] ss:$2 sm:$0xff]
    %v291 = vld [vmem:[#allocation2] sm:$0xff]
    %v292 = vld [vmem:[#allocation2 + $0x8] sm:$0xff]
    %v293 = vld [vmem:[#allocation2 + $0x10] sm:$0xff]
    %v294 = vld [vmem:[#allocation2 + $0x18] sm:$0xff]
    %v295 = vld [vmem:[#allocation2 + $0x20] sm:$0xff]
    %v296 = vld [vmem:[#allocation2 + $0x28] sm:$0xff]
    %v297 = vld [vmem:[#allocation2 + $0x30] sm:$0xff]
    %v298 = vld [vmem:[#allocation2 + $0x38] sm:$0xff]
    %v299 = vld [vmem:[#allocation2 + $0x40] sm:$0xff]
    %v300 = vld [vmem:[#allocation2 + $0x48] sm:$0xff]
    %v301 = vld [vmem:[#allocation2 + $0x50] sm:$0xff]
    %v302 = vld [vmem:[#allocation2 + $0x58] sm:$0xff]
    %v303 = vld [vmem:[#allocation2 + $0x60] sm:$0xff]
    %v304 = vld [vmem:[#allocation2 + $0x68] sm:$0xff]
    %v305 = vld [vmem:[#allocation2 + $0x70] sm:$0xff]
    %v306 = vld [vmem:[#allocation2 + $0x78] sm:$0xff]
    %v307 = vld [vmem:[#allocation2 + $0x80] sm:$0xff]
    %v308 = vld [vmem:[#allocation2 + $0x88] sm:$0xff]
    %v309 = vadd.f32 %v291, %v256
    %v310 = vadd.f32 %v292, %v258
    %v311 = vadd.f32 %v293, %v260
    %v312 = vadd.f32 %v294, %v262
    %v313 = vadd.f32 %v295, %v264
    %v314 = vadd.f32 %v296, %v266
    %v315 = vadd.f32 %v297, %v268
    %v316 = vadd.f32 %v298, %v270
    %v317 = vadd.f32 %v299, %v272
    %v318 = vadd.f32 %v300, %v274
    %v319 = vadd.f32 %v301, %v276
    %v320 = vadd.f32 %v302, %v278
    %v321 = vadd.f32 %v303, %v280
    %v322 = vadd.f32 %v304, %v282
    %v323 = vadd.f32 %v305, %v284
    %v324 = vadd.f32 %v306, %v286
    %v325 = vadd.f32 %v307, %v288
    %v326 = vadd.f32 %v308, %v290
    %327 = vst.msk [vmem:[#allocation2] sm:$0xff] %vm48, %v309
    %328 = vst.msk [vmem:[#allocation2 + $0x8] sm:$0xff] %vm48, %v310
    %329 = vst.msk [vmem:[#allocation2 + $0x10] sm:$0xff] %vm48, %v311
    %330 = vst.msk [vmem:[#allocation2 + $0x18] sm:$0xff] %vm48, %v312
    %331 = vst.msk [vmem:[#allocation2 + $0x20] sm:$0xff] %vm48, %v313
    %332 = vst.msk [vmem:[#allocation2 + $0x28] sm:$0xff] %vm48, %v314
    %333 = vst.msk [vmem:[#allocation2 + $0x30] sm:$0xff] %vm48, %v315
    %334 = vst.msk [vmem:[#allocation2 + $0x38] sm:$0xff] %vm48, %v316
    %335 = vst.msk [vmem:[#allocation2 + $0x40] sm:$0xff] %vm48, %v317
    %336 = vst.msk [vmem:[#allocation2 + $0x48] sm:$0xff] %vm48, %v318
    %337 = vst.msk [vmem:[#allocation2 + $0x50] sm:$0xff] %vm48, %v319
    %338 = vst.msk [vmem:[#allocation2 + $0x58] sm:$0xff] %vm48, %v320
    %339 = vst.msk [vmem:[#allocation2 + $0x60] sm:$0xff] %vm48, %v321
    %340 = vst.msk [vmem:[#allocation2 + $0x68] sm:$0xff] %vm48, %v322
    %341 = vst.msk [vmem:[#allocation2 + $0x70] sm:$0xff] %vm48, %v323
    %342 = vst.msk [vmem:[#allocation2 + $0x78] sm:$0xff] %vm48, %v324
    %343 = vst.msk [vmem:[#allocation2 + $0x80] sm:$0xff] %vm48, %v325
    %344 = vst.msk [vmem:[#allocation2 + $0x88] sm:$0xff] %vm48, %v326
    %v345 = vld [vmem:[#allocation3] sm:$0xff]
    %v346 = vld [vmem:[#allocation3 + $0x8] sm:$0xff]
    %v347 = vld [vmem:[#allocation3 + $0x10] sm:$0xff]
    %v348 = vld [vmem:[#allocation3 + $0x18] sm:$0xff]
    %v349 = vld [vmem:[#allocation3 + $0x20] sm:$0xff]
    %v350 = vld [vmem:[#allocation3 + $0x28] sm:$0xff]
    %v351 = vld [vmem:[#allocation3 + $0x30] sm:$0xff]
    %v352 = vld [vmem:[#allocation3 + $0x38] sm:$0xff]
    %v353 = vld [vmem:[#allocation3 + $0x40] sm:$0xff]
    %v354 = vld [vmem:[#allocation3 + $0x48] sm:$0xff]
    %v355 = vld [vmem:[#allocation3 + $0x50] sm:$0xff]
    %v356 = vld [vmem:[#allocation3 + $0x58] sm:$0xff]
    %v357 = vld [vmem:[#allocation3 + $0x60] sm:$0xff]
    %v358 = vld [vmem:[#allocation3 + $0x68] sm:$0xff]
    %v359 = vld [vmem:[#allocation3 + $0x70] sm:$0xff]
    %v360 = vld [vmem:[#allocation3 + $0x78] sm:$0xff]
    %v361 = vld [vmem:[#allocation3 + $0x80] sm:$0xff]
    %v362 = vld [vmem:[#allocation3 + $0x88] sm:$0xff]
    %v363 = vmax.f32 %v345, %v256
    %v364 = vmax.f32 %v346, %v258
    %v365 = vmax.f32 %v347, %v260
    %v366 = vmax.f32 %v348, %v262
    %v367 = vmax.f32 %v349, %v264
    %v368 = vmax.f32 %v350, %v266
    %v369 = vmax.f32 %v351, %v268
    %v370 = vmax.f32 %v352, %v270
    %v371 = vmax.f32 %v353, %v272
    %v372 = vmax.f32 %v354, %v274
    %v373 = vmax.f32 %v355, %v276
    %v374 = vmax.f32 %v356, %v278
    %v375 = vmax.f32 %v357, %v280
    %v376 = vmax.f32 %v358, %v282
    %v377 = vmax.f32 %v359, %v284
    %v378 = vmax.f32 %v360, %v286
    %v379 = vmax.f32 %v361, %v288
    %v380 = vmax.f32 %v362, %v290
    %381 = vst.msk [vmem:[#allocation3] sm:$0xff] %vm48, %v363
    %382 = vst.msk [vmem:[#allocation3 + $0x8] sm:$0xff] %vm48, %v364
    %383 = vst.msk [vmem:[#allocation3 + $0x10] sm:$0xff] %vm48, %v365
    %384 = vst.msk [vmem:[#allocation3 + $0x18] sm:$0xff] %vm48, %v366
    %385 = vst.msk [vmem:[#allocation3 + $0x20] sm:$0xff] %vm48, %v367
    %386 = vst.msk [vmem:[#allocation3 + $0x28] sm:$0xff] %vm48, %v368
    %387 = vst.msk [vmem:[#allocation3 + $0x30] sm:$0xff] %vm48, %v369
    %388 = vst.msk [vmem:[#allocation3 + $0x38] sm:$0xff] %vm48, %v370
    %389 = vst.msk [vmem:[#allocation3 + $0x40] sm:$0xff] %vm48, %v371
    %390 = vst.msk [vmem:[#allocation3 + $0x48] sm:$0xff] %vm48, %v372
    %391 = vst.msk [vmem:[#allocation3 + $0x50] sm:$0xff] %vm48, %v373
    %392 = vst.msk [vmem:[#allocation3 + $0x58] sm:$0xff] %vm48, %v374
    %393 = vst.msk [vmem:[#allocation3 + $0x60] sm:$0xff] %vm48, %v375
    %394 = vst.msk [vmem:[#allocation3 + $0x68] sm:$0xff] %vm48, %v376
    %395 = vst.msk [vmem:[#allocation3 + $0x70] sm:$0xff] %vm48, %v377
    %396 = vst.msk [vmem:[#allocation3 + $0x78] sm:$0xff] %vm48, %v378
    %397 = vst.msk [vmem:[#allocation3 + $0x80] sm:$0xff] %vm48, %v379
    %398 = vst.msk [vmem:[#allocation3 + $0x88] sm:$0xff] %vm48, %v380
    %399 = vst.msk [vmem:[#allocation3] sm:$0xff] %vm48, -inf
    %s400 = scalar_lea.vmem [#allocation3], 136
    %401 = vst.msk [vmem:[%s400] sm:$0xff] %vm48, -inf
    %v402 = vld [vmem:[#allocation2] sm:$0xff]
    %v403 = vld [vmem:[#allocation2 + $0x10] sm:$0xff]
    %v404 = vld [vmem:[#allocation2 + $0x20] sm:$0xff]
    %v405 = vld [vmem:[#allocation2 + $0x30] sm:$0xff]
    %v406 = vld [vmem:[#allocation2 + $0x40] sm:$0xff]
    %v407 = vld [vmem:[#allocation2 + $0x50] sm:$0xff]
    %v408 = vld [vmem:[#allocation2 + $0x60] sm:$0xff]
    %v409 = vld [vmem:[#allocation2 + $0x70] sm:$0xff]
    %v410 = vld [vmem:[#allocation3] sm:$0xff]
    %v411 = vld [vmem:[#allocation3 + $0x10] sm:$0xff]
    %v412 = vld [vmem:[#allocation3 + $0x20] sm:$0xff]
    %v413 = vld [vmem:[#allocation3 + $0x30] sm:$0xff]
    %v414 = vld [vmem:[#allocation3 + $0x40] sm:$0xff]
    %v415 = vld [vmem:[#allocation3 + $0x50] sm:$0xff]
    %v416 = vld [vmem:[#allocation3 + $0x60] sm:$0xff]
    %v417 = vld [vmem:[#allocation3 + $0x70] sm:$0xff]
    %s418 = scalar_lea.vmem [#allocation2], 8
    %v419 = vld [vmem:[%s418] sm:$0xff]
    %v420 = vld [vmem:[%s418 + $0x10] sm:$0xff]
    %v421 = vld [vmem:[%s418 + $0x20] sm:$0xff]
    %v422 = vld [vmem:[%s418 + $0x30] sm:$0xff]
    %v423 = vld [vmem:[%s418 + $0x40] sm:$0xff]
    %v424 = vld [vmem:[%s418 + $0x50] sm:$0xff]
    %v425 = vld [vmem:[%s418 + $0x60] sm:$0xff]
    %v426 = vld [vmem:[%s418 + $0x70] sm:$0xff]
    %v427 = vadd.f32 %v402, %v419
    %v428 = vadd.f32 %v403, %v420
    %v429 = vadd.f32 %v404, %v421
    %v430 = vadd.f32 %v405, %v422
    %v431 = vadd.f32 %v406, %v423
    %v432 = vadd.f32 %v407, %v424
    %v433 = vadd.f32 %v408, %v425
    %v434 = vadd.f32 %v409, %v426
    %s435 = scalar_lea.vmem [#allocation3], 8
    %v436 = vld [vmem:[%s435] sm:$0xff]
    %v437 = vld [vmem:[%s435 + $0x10] sm:$0xff]
    %v438 = vld [vmem:[%s435 + $0x20] sm:$0xff]
    %v439 = vld [vmem:[%s435 + $0x30] sm:$0xff]
    %v440 = vld [vmem:[%s435 + $0x40] sm:$0xff]
    %v441 = vld [vmem:[%s435 + $0x50] sm:$0xff]
    %v442 = vld [vmem:[%s435 + $0x60] sm:$0xff]
    %v443 = vld [vmem:[%s435 + $0x70] sm:$0xff]
    %v444 = vmax.f32 %v410, %v436
    %v445 = vmax.f32 %v411, %v437
    %v446 = vmax.f32 %v412, %v438
    %v447 = vmax.f32 %v413, %v439
    %v448 = vmax.f32 %v414, %v440
    %v449 = vmax.f32 %v415, %v441
    %v450 = vmax.f32 %v416, %v442
    %v451 = vmax.f32 %v417, %v443
    %s452 = scalar_lea.vmem [#allocation2], 16
    %v453 = vld [vmem:[%s452] sm:$0xff]
    %v454 = vld [vmem:[%s452 + $0x10] sm:$0xff]
    %v455 = vld [vmem:[%s452 + $0x20] sm:$0xff]
    %v456 = vld [vmem:[%s452 + $0x30] sm:$0xff]
    %v457 = vld [vmem:[%s452 + $0x40] sm:$0xff]
    %v458 = vld [vmem:[%s452 + $0x50] sm:$0xff]
    %v459 = vld [vmem:[%s452 + $0x60] sm:$0xff]
    %v460 = vld [vmem:[%s452 + $0x70] sm:$0xff]
    %v461 = vadd.f32 %v427, %v453
    %v462 = vadd.f32 %v428, %v454
    %v463 = vadd.f32 %v429, %v455
    %v464 = vadd.f32 %v430, %v456
    %v465 = vadd.f32 %v431, %v457
    %v466 = vadd.f32 %v432, %v458
    %v467 = vadd.f32 %v433, %v459
    %v468 = vadd.f32 %v434, %v460
    %s469 = scalar_lea.vmem [#allocation3], 16
    %v470 = vld [vmem:[%s469] sm:$0xff]
    %v471 = vld [vmem:[%s469 + $0x10] sm:$0xff]
    %v472 = vld [vmem:[%s469 + $0x20] sm:$0xff]
    %v473 = vld [vmem:[%s469 + $0x30] sm:$0xff]
    %v474 = vld [vmem:[%s469 + $0x40] sm:$0xff]
    %v475 = vld [vmem:[%s469 + $0x50] sm:$0xff]
    %v476 = vld [vmem:[%s469 + $0x60] sm:$0xff]
    %v477 = vld [vmem:[%s469 + $0x70] sm:$0xff]
    %v478 = vmax.f32 %v444, %v470
    %v479 = vmax.f32 %v445, %v471
    %v480 = vmax.f32 %v446, %v472
    %v481 = vmax.f32 %v447, %v473
    %v482 = vmax.f32 %v448, %v474
    %v483 = vmax.f32 %v449, %v475
    %v484 = vmax.f32 %v450, %v476
    %v485 = vmax.f32 %v451, %v477
    %s486 = sld [smem:[#allocation4]]
    %v487 = vmul.f32 %v461, 0.11111111
    %v488 = vmul.f32 %v462, 0.11111111
    %v489 = vmul.f32 %v463, 0.11111111
    %v490 = vmul.f32 %v464, 0.11111111
    %v491 = vmul.f32 %v465, 0.11111111
    %v492 = vmul.f32 %v466, 0.11111111
    %v493 = vmul.f32 %v467, 0.11111111
    %v494 = vmul.f32 %v468, 0.11111111
    %v495 = vstv %s486
    %v496 = vmul.f32 %v478, %v495
    %v497 = vmul.f32 %v479, %v495
    %v498 = vmul.f32 %v480, %v495
    %v499 = vmul.f32 %v481, %v495
    %v500 = vmul.f32 %v482, %v495
    %v501 = vmul.f32 %v483, %v495
    %v502 = vmul.f32 %v484, %v495
    %v503 = vmul.f32 %v485, %v495
    %v504 = vadd.f32 %v487, %v496
    %v505 = vadd.f32 %v488, %v497
    %v506 = vadd.f32 %v489, %v498
    %v507 = vadd.f32 %v490, %v499
    %v508 = vadd.f32 %v491, %v500
    %v509 = vadd.f32 %v492, %v501
    %v510 = vadd.f32 %v493, %v502
    %v511 = vadd.f32 %v494, %v503
    %512 = vst.msk [vmem:[#allocation5] sm:$0xff] %vm48, %v504
    %513 = vst.msk [vmem:[#allocation5 + $0x8] sm:$0xff] %vm48, %v505
    %514 = vst.msk [vmem:[#allocation5 + $0x10] sm:$0xff] %vm48, %v506
    %515 = vst.msk [vmem:[#allocation5 + $0x18] sm:$0xff] %vm48, %v507
    %516 = vst.msk [vmem:[#allocation5 + $0x20] sm:$0xff] %vm48, %v508
    %517 = vst.msk [vmem:[#allocation5 + $0x28] sm:$0xff] %vm48, %v509
    %518 = vst.msk [vmem:[#allocation5 + $0x30] sm:$0xff] %vm48, %v510
    %519 = vst.msk [vmem:[#allocation5 + $0x38] sm:$0xff] %vm48, %v511
    // Predicated region
    $region10: #{tpu_custom_call.1} parent=1 // pred_check
      _
    $region11: #{tpu_custom_call.1} parent=1 // pred_check_branch
      %521 = sbr.rel (0) target = $region13
    $region12: #{tpu_custom_call.1} parent=1 // pred_region
      %s523 = ssub.s32 1024, 1024
      %524 = vsyncadd [#allocation6], %s523
      %s525 = sshll.u32 [#allocation5], 4
      %s526 = int_to_ptr.vmem [resolvable:$true] %s525
      %531 = dma.vmem_to_hbm [thread:$0]  %s526, 1024, %s2, [#allocation6], 128, 128, 8
    $region13: #{tpu_custom_call.1} parent=1 // pred_fallthru
      _
    // Predicated region
    $region14: #{tpu_custom_call.1} parent=1 // pred_check
      _
    $region15: #{tpu_custom_call.1} parent=1 // pred_check_branch
      %533 = sbr.rel (0) target = $region17
    $region16: #{tpu_custom_call.1} parent=1 // pred_region
      %534 = dma.done [#allocation6], 1024
    $region17: #{tpu_custom_call.1} parent=1 // pred_fallthru
      _
    %535 = vsyncpa [#allocation6], 1

</llo_original>
